<compile_context>
chip_gen: v6e
topology: v6e:2x2x1
jax: 0.10.0
libtpu: 0.0.40
codegen_flags: <defaults>
</compile_context>

<pallas_src>
import numpy as np
import jax
import jax.numpy as jnp
from jax.experimental import pallas as pl
from jax.experimental.pallas import tpu as pltpu


def _round_up(x, m):
    return ((x + m - 1) // m) * m


def _pick_tile(total, cap, base=128):
    """Largest multiple of `base` that divides `total` and is <= min(cap, total)."""
    cap = max(base, min(cap, total))
    best = base
    for t in range(base, cap + 1, base):
        if total % t == 0:
            best = t
    return best


def _pick_batch_tile(batch, cap):
    """Adaptive batch tile (multiple of 8) minimizing padding waste."""
    cap = max(8, (cap // 8) * 8)
    b8 = _round_up(batch, 8)
    if b8 <= cap:
        return b8, b8                       # one tile, minimal padding
    best_tile, best_pad = cap, _round_up(batch, cap)
    for t in range(cap, cap // 2 - 1, -8):  # tiles in [cap/2, cap]
        p = _round_up(batch, t)
        if p < best_pad or (p == best_pad and t > best_tile):
            best_tile, best_pad = t, p
    return best_tile, best_pad


def ssp_matmul_kernel(cs_ref, tab_ref, out_ref):
    # cs_ref:  (tb, tk)  [cos(shift) | sin(shift)] slab
    # tab_ref: (tk, ta)  stacked [scale*cos(phase); -scale*sin(phase)] slab
    # out_ref: (tb, ta)  f32 output tile, VMEM-resident across the K axis
    k = pl.program_id(2)
    partial = jnp.dot(cs_ref[...], tab_ref[...], preferred_element_type=jnp.float32)

    @pl.when(k == 0)
    def _():
        out_ref[...] = partial

    @pl.when(k > 0)
    def _():
        out_ref[...] += partial


def make_ssp_transform(coord_dim, ssp_dim, *, tb=512, ta=256, tk=512, use_bf16=False):
    """Precompute the stacked (padded) DFT table once; return a jitted apply fn."""
    n_param = (ssp_dim - 1) // 2
    tau_len = ssp_dim // 2 + 1
    k_pad = _round_up(tau_len, 128)
    a_pad = _round_up(ssp_dim, 128)
    k2 = 2 * k_pad                                          # stacked cos|sin K extent

    # const_scaling: 2/ssp_dim, except k=0 (and last k when ssp_dim even) -> 1/ssp_dim
    scale = np.full((tau_len,), 2.0 / ssp_dim, dtype=np.float64)
    scale[0] = 1.0 / ssp_dim
    if ssp_dim % 2 == 0:
        scale[-1] = 1.0 / ssp_dim

    # phase[k, a] = 2*pi*k*a/ssp_dim with exact integer mod-ssp_dim range reduction
    # (mathematically identical since cos is 2*pi-periodic).
    k_idx = np.arange(tau_len, dtype=np.int64)
    a_idx = np.arange(ssp_dim, dtype=np.int64)
    ka_mod = (k_idx[:, None] * a_idx[None, :]) % ssp_dim
    phase = ka_mod.astype(np.float64) * (2.0 * np.pi / ssp_dim)     # (tau_len, ssp_dim)

    # Stacked, zero-padded table: rows [0:tau_len] = scale*cos(phase),
    # rows [k_pad:k_pad+tau_len] = -scale*sin(phase); padded rows/cols are 0.
    tab_np = np.zeros((k2, a_pad), dtype=np.float32)
    tab_np[:tau_len, :ssp_dim] = (scale[:, None] * np.cos(phase)).astype(np.float32)
    tab_np[k_pad:k_pad + tau_len, :ssp_dim] = (-scale[:, None] * np.sin(phase)).astype(np.float32)

    op_dtype = jnp.bfloat16 if use_bf16 else jnp.float32
    table = jnp.asarray(tab_np).astype(op_dtype)

    ta_eff = _pick_tile(a_pad, ta)
    tk_eff = _pick_tile(k2, tk)

    def apply(inputs, phis):
        batch = inputs.shape[0]
        assert inputs.shape == (batch, coord_dim)
        assert phis.shape == (coord_dim, n_param)

        x = inputs.astype(jnp.float32)
        # full_phis with zero-padded K columns (col 0 and cols > n_param stay 0).
        full_phis = jnp.zeros((coord_dim, k_pad), dtype=jnp.float32)
        full_phis = full_phis.at[:, 1:n_param + 1].set(phis.astype(jnp.float32))

        # shift / cos / sin computed ONCE per (b, k) in XLA (hoisted out of A tiling).
        shift = x @ full_phis                                       # (B, k_pad)
        cs = jnp.concatenate([jnp.cos(shift), jnp.sin(shift)], axis=1)  # (B, 2*k_pad)
        cs = cs.astype(op_dtype)

        tb_eff, b_pad = _pick_batch_tile(batch, tb)
        if b_pad != batch:
            cs = jnp.pad(cs, ((0, b_pad - batch), (0, 0)))          # zero rows -> zero out

        grid = (b_pad // tb_eff, a_pad // ta_eff, k2 // tk_eff)

        out = pl.pallas_call(
            ssp_matmul_kernel,
            out_shape=jax.ShapeDtypeStruct((b_pad, a_pad), jnp.float32),
            grid_spec=pltpu.PrefetchScalarGridSpec(
                num_scalar_prefetch=0,
                grid=grid,
                in_specs=[
                    pl.BlockSpec((tb_eff, tk_eff), lambda i, j, k: (i, k)),
                    pl.BlockSpec((tk_eff, ta_eff), lambda i, j, k: (k, j)),
                ],
                out_specs=pl.BlockSpec((tb_eff, ta_eff), lambda i, j, k: (i, j)),
            ),
            compiler_params=pltpu.CompilerParams(
                dimension_semantics=("parallel", "parallel", "arbitrary"),
                vmem_limit_bytes=32 * 1024 * 1024,  # safe on v7x's 64 MiB per-TC VMEM
            ),
        )(cs, table)

        return out[:batch, :ssp_dim]

    return jax.jit(apply)


def ssp_transform_ref(inputs, phis, ssp_dim):
    """Pure-JAX reference mirroring the PyTorch forward, for validation."""
    batch, coord_dim = inputs.shape
    n_param = (ssp_dim - 1) // 2
    tau_len = ssp_dim // 2 + 1
    full_phis = jnp.zeros((coord_dim, tau_len), dtype=inputs.dtype)
    full_phis = full_phis.at[:, 1:n_param + 1].set(phis)
    shift = inputs @ full_phis                                      # (B, K)
    # phase = 2*pi*k*a/ssp_dim; integer mod-ssp_dim reduction is mathematically
    # identical (cos is 2*pi-periodic) and keeps the f32 reference accurate for
    # large k*a products.
    k_idx = jnp.arange(tau_len)
    a_idx = jnp.arange(ssp_dim)
    ka_mod = (a_idx[:, None] * k_idx[None, :]) % ssp_dim            # (A, K)
    const_phase = ka_mod.astype(jnp.float32) * (2.0 * np.pi / ssp_dim)
    const_scaling = jnp.full((tau_len,), 2.0 / ssp_dim)
    const_scaling = const_scaling.at[0].set(1.0 / ssp_dim)
    if ssp_dim % 2 == 0:
        const_scaling = const_scaling.at[-1].set(1.0 / ssp_dim)
    ang = shift[:, None, :] + const_phase[None, :, :]
    return jnp.sum(jnp.cos(ang) * const_scaling[None, None, :], axis=2)


if __name__ == "__main__":
    # Test 1: small shapes consistent with the module: coord_dim=4, ssp_dim=32, batch=8.
    coord_dim, ssp_dim, batch = 4, 32, 8
    n_param = (ssp_dim - 1) // 2

    key = jax.random.PRNGKey(0)
    k_phis, k_x = jax.random.split(key)
    # phis ~ Uniform(-pi+0.001, pi-0.001), matching torch.nn.init.uniform_
    phis = jax.random.uniform(k_phis, (coord_dim, n_param), dtype=jnp.float32,
                              minval=-np.pi + 0.001, maxval=np.pi - 0.001)
    x = jax.random.normal(k_x, (batch, coord_dim), dtype=jnp.float32)

    ssp = make_ssp_transform(coord_dim, ssp_dim)
    out = jax.block_until_ready(ssp(x, phis))
    ref = ssp_transform_ref(x, phis, ssp_dim)
    assert out.shape == (batch, ssp_dim)
    np.testing.assert_allclose(np.asarray(out), np.asarray(ref), rtol=1e-5, atol=1e-5)

    # Test 2: odd ssp_dim, odd batch, forced small K tile -> exercises the
    # multi-step K accumulation path (grid K > 1) and the padding/slicing paths.
    cd2, sd2, b2 = 3, 63, 37
    np2 = (sd2 - 1) // 2
    kp2, kx2 = jax.random.split(jax.random.PRNGKey(1))
    phis2 = jax.random.uniform(kp2, (cd2, np2), dtype=jnp.float32,
                               minval=-np.pi + 0.001, maxval=np.pi - 0.001)
    x2 = jax.random.normal(kx2, (b2, cd2), dtype=jnp.float32)

    ssp2 = make_ssp_transform(cd2, sd2, tk=128)
    out2 = jax.block_until_ready(ssp2(x2, phis2))
    ref2 = ssp_transform_ref(x2, phis2, sd2)
    assert out2.shape == (b2, sd2)
    np.testing.assert_allclose(np.asarray(out2), np.asarray(ref2), rtol=1e-5, atol=1e-5)

    print("KERNEL_OK")
</pallas_src>

<mosaic_0001>
module attributes {stable_mosaic.version = 11 : i64} {
  func.func @ssp_matmul_kernel(%arg0: i32, %arg1: i32, %arg2: i32, %arg3: memref<8x256xf32, #tpu.memory_space<vmem>>, %arg4: memref<256x128xf32, #tpu.memory_space<vmem>>, %arg5: memref<8x128xf32, #tpu.memory_space<vmem>>) attributes {dimension_semantics = [#tpu.dimension_semantics<parallel>, #tpu.dimension_semantics<parallel>, #tpu.dimension_semantics<arbitrary>], iteration_bounds = array<i64: 1, 1, 1>, scalar_prefetch = 0 : i64, scratch_operands = 0 : i64, tpu.core_type = #tpu.core_type<tc>, window_params = [{transform_indices = @transform_0, window_bounds = array<i64: 8, 256>}, {transform_indices = @transform_1, window_bounds = array<i64: 256, 128>}, {transform_indices = @transform_2, window_bounds = array<i64: 8, 128>}]} {
    %c0 = arith.constant 0 : index
    %c0_0 = arith.constant 0 : index
    %0 = vector.load %arg3[%c0, %c0_0] : memref<8x256xf32, #tpu.memory_space<vmem>>, vector<8x256xf32>
    %c0_1 = arith.constant 0 : index
    %c0_2 = arith.constant 0 : index
    %1 = vector.load %arg4[%c0_1, %c0_2] : memref<256x128xf32, #tpu.memory_space<vmem>>, vector<256x128xf32>
    %cst = arith.constant dense<0.000000e+00> : vector<8x128xf32>
    %2 = tpu.matmul %0, %1, %cst {dimension_numbers = #tpu.dot_dimension_numbers<[1], [0], [0], [1], [0, 0, 1, 1], [], []>} : vector<8x256xf32>, vector<256x128xf32>, vector<8x128xf32> -> vector<8x128xf32>
    %c0_i32 = arith.constant 0 : i32
    %3 = arith.cmpi eq, %arg2, %c0_i32 : i32
    %4 = arith.extui %3 : i1 to i32
    %c0_i32_3 = arith.constant 0 : i32
    %5 = arith.cmpi ne, %4, %c0_i32_3 : i32
    scf.if %5 {
      %c0_6 = arith.constant 0 : index
      %c0_7 = arith.constant 0 : index
      %9 = vector.load %arg5[%c0_6, %c0_7] : memref<8x128xf32, #tpu.memory_space<vmem>>, vector<8x128xf32>
      tpu.vector_store %arg5[%c0_6, %c0_7], %2 {strides = array<i32>} : memref<8x128xf32, #tpu.memory_space<vmem>>, vector<8x128xf32>,
    } else {
    }
    %c0_i32_4 = arith.constant 0 : i32
    %6 = arith.cmpi sgt, %arg2, %c0_i32_4 : i32
    %7 = arith.extui %6 : i1 to i32
    %c0_i32_5 = arith.constant 0 : i32
    %8 = arith.cmpi ne, %7, %c0_i32_5 : i32
    scf.if %8 {
      %c0_6 = arith.constant 0 : index
      %c0_7 = arith.constant 0 : index
      %9 = vector.load %arg5[%c0_6, %c0_7] : memref<8x128xf32, #tpu.memory_space<vmem>>, vector<8x128xf32>
      %10 = arith.addf %9, %2 : vector<8x128xf32>
      %c0_8 = arith.constant 0 : index
      %c0_9 = arith.constant 0 : index
      %11 = vector.load %arg5[%c0_8, %c0_9] : memref<8x128xf32, #tpu.memory_space<vmem>>, vector<8x128xf32>
      tpu.vector_store %arg5[%c0_8, %c0_9], %10 {strides = array<i32>} : memref<8x128xf32, #tpu.memory_space<vmem>>, vector<8x128xf32>,
    } else {
    }
    return
  }
  func.func @transform_0(%arg0: i32, %arg1: i32, %arg2: i32) -> (i32, i32) {
    %c0_i32 = arith.constant 0 : i32
    return %arg0, %arg2 : i32, i32
  }
  func.func @transform_1(%arg0: i32, %arg1: i32, %arg2: i32) -> (i32, i32) {
    %c0_i32 = arith.constant 0 : i32
    return %arg2, %arg1 : i32, i32
  }
  func.func @transform_2(%arg0: i32, %arg1: i32, %arg2: i32) -> (i32, i32) {
    %c0_i32 = arith.constant 0 : i32
    return %arg0, %arg1 : i32, i32
  }
}

</mosaic_0001>

<llo_original>
// kernel: apply.1
$region0: #{apply.1}
  #allocation0 [shape = 'u32[]', space=smem, size = 0x4, offset = 0x4, fixed_abs, tag = 'smem constant byte address 0x4 - core index']
  #allocation1 [shape = 'u32[144,128]{1,0:T(1,128)}', space=vmem, size = 0x12000, scoped, tag = 'internal scratch']
  %s0 = inlined_call_operand.vmem [shape: f32[8,256], index: 0, kind: input, shape index: {}]
  %s1 = inlined_call_operand.hbm [shape: f32[256,128], index: 1, kind: input, shape index: {}]
  %s2 = inlined_call_operand.hbm [shape: f32[8,128], index: 2, kind: output, shape index: {}]
  %s3 = sld [smem:[#allocation0]]
  $region30: #{apply.1} parent=0
    _
  %s5 = ssub.s32 1, %s3
  %s6 = scalar_select 0, %s5, %s3
  $region1: #{apply.1} parent=0
    #allocation2 [shape = 'u8[131072]{0}', space=vmem, size = 0x20000, scoped, tag = 'input window, operand 1, single buffered']
    #allocation3 [shape = 's32[1]{0}', space=sflag, size = 0x4, scoped, tag = 'scoped memory for apply.1']
    #allocation4 [shape = 's32[1]{0}', space=sflag, size = 0x4, scoped, tag = 'scoped memory for apply.1']
    #allocation5 [shape = 'u8[4096]{0}', space=vmem, size = 0x1000, scoped, tag = 'output window, operand 0, single buffered']
    %7 = vsyncpa [#allocation3], 0
    %8 = vsyncpa [#allocation4], 0
    // Predicated region
    $region2: #{apply.1} parent=1 // pred_check
      _
    $region3: #{apply.1} parent=1 // pred_check_branch
      %10 = sbr.rel (0) target = $region5
    $region4: #{apply.1} parent=1 // pred_region
      _
    $region5: #{apply.1} parent=1 // pred_fallthru
      _
    // Predicated region
    $region6: #{apply.1} parent=1 // pred_check
      _
    $region7: #{apply.1} parent=1 // pred_check_branch
      %12 = sbr.rel (0) target = $region9
    $region8: #{apply.1} parent=1 // pred_region
      %s14 = ssub.s32 4096, 4096
      %15 = vsyncadd [#allocation3], %s14
      %s16 = sshll.u32 [#allocation2], 4
      %s17 = int_to_ptr.vmem [resolvable:$true] %s16
      %22 = dma.hbm_to_vmem [thread:$0]  %s1, 4096, %s17, [#allocation3], 128, 128, 8
    $region9: #{apply.1} parent=1 // pred_fallthru
      _
    // Predicated region
    $region10: #{apply.1} parent=1 // pred_check
      _
    $region11: #{apply.1} parent=1 // pred_check_branch
      %24 = sbr.rel (0) target = $region13
    $region12: #{apply.1} parent=1 // pred_region
      %25 = dma.done [#allocation3], 4096
    $region13: #{apply.1} parent=1 // pred_fallthru
      _
    %v26 = vld [vmem:[%s0] sm:$0xff]
    %v27 = vld [vmem:[%s0 + $0x8] sm:$0xff]
    %v28 = vld [vmem:[#allocation2] sm:$0xff]
    %v29 = vld [vmem:[#allocation2 + $0x8] sm:$0xff]
    %v30 = vld [vmem:[#allocation2 + $0x10] sm:$0xff]
    %v31 = vld [vmem:[#allocation2 + $0x18] sm:$0xff]
    %v32 = vld [vmem:[#allocation2 + $0x20] sm:$0xff]
    %v33 = vld [vmem:[#allocation2 + $0x28] sm:$0xff]
    %v34 = vld [vmem:[#allocation2 + $0x30] sm:$0xff]
    %v35 = vld [vmem:[#allocation2 + $0x38] sm:$0xff]
    %v36 = vld [vmem:[#allocation2 + $0x40] sm:$0xff]
    %v37 = vld [vmem:[#allocation2 + $0x48] sm:$0xff]
    %v38 = vld [vmem:[#allocation2 + $0x50] sm:$0xff]
    %v39 = vld [vmem:[#allocation2 + $0x58] sm:$0xff]
    %v40 = vld [vmem:[#allocation2 + $0x60] sm:$0xff]
    %v41 = vld [vmem:[#allocation2 + $0x68] sm:$0xff]
    %v42 = vld [vmem:[#allocation2 + $0x70] sm:$0xff]
    %v43 = vld [vmem:[#allocation2 + $0x78] sm:$0xff]
    %v44 = vld [vmem:[#allocation2 + $0x80] sm:$0xff]
    %v45 = vld [vmem:[#allocation2 + $0x88] sm:$0xff]
    %v46 = vld [vmem:[#allocation2 + $0x90] sm:$0xff]
    %v47 = vld [vmem:[#allocation2 + $0x98] sm:$0xff]
    %v48 = vld [vmem:[#allocation2 + $0xa0] sm:$0xff]
    %v49 = vld [vmem:[#allocation2 + $0xa8] sm:$0xff]
    %v50 = vld [vmem:[#allocation2 + $0xb0] sm:$0xff]
    %v51 = vld [vmem:[#allocation2 + $0xb8] sm:$0xff]
    %v52 = vld [vmem:[#allocation2 + $0xc0] sm:$0xff]
    %v53 = vld [vmem:[#allocation2 + $0xc8] sm:$0xff]
    %v54 = vld [vmem:[#allocation2 + $0xd0] sm:$0xff]
    %v55 = vld [vmem:[#allocation2 + $0xd8] sm:$0xff]
    %v56 = vld [vmem:[#allocation2 + $0xe0] sm:$0xff]
    %v57 = vld [vmem:[#allocation2 + $0xe8] sm:$0xff]
    %v58 = vld [vmem:[#allocation2 + $0xf0] sm:$0xff]
    %v59 = vld [vmem:[#allocation2 + $0xf8] sm:$0xff]
    %60 = vmatprep.subr.mxu0 0.0
    %61 = vmatpush1.msra.mxu0 %v43
    %62 = vmatprep.subr.mxu0 0.0
    %63 = vmatpush1.msra.mxu0 %v42
    %64 = vmatprep.subr.mxu0 0.0
    %65 = vmatpush1.msra.mxu0 %v41
    %66 = vmatprep.subr.mxu0 0.0
    %67 = vmatpush1.msra.mxu0 %v40
    %68 = vmatprep.subr.mxu0 0.0
    %69 = vmatpush1.msra.mxu0 %v39
    %70 = vmatprep.subr.mxu0 0.0
    %71 = vmatpush1.msra.mxu0 %v38
    %72 = vmatprep.subr.mxu0 0.0
    %73 = vmatpush1.msra.mxu0 %v37
    %74 = vmatprep.subr.mxu0 0.0
    %75 = vmatpush1.msra.mxu0 %v36
    %76 = vmatprep.subr.mxu0 0.0
    %77 = vmatpush1.msra.mxu0 %v35
    %78 = vmatprep.subr.mxu0 0.0
    %79 = vmatpush1.msra.mxu0 %v34
    %80 = vmatprep.subr.mxu0 0.0
    %81 = vmatpush1.msra.mxu0 %v33
    %82 = vmatprep.subr.mxu0 0.0
    %83 = vmatpush1.msra.mxu0 %v32
    %84 = vmatprep.subr.mxu0 0.0
    %85 = vmatpush1.msra.mxu0 %v31
    %86 = vmatprep.subr.mxu0 0.0
    %87 = vmatpush1.msra.mxu0 %v30
    %88 = vmatprep.subr.mxu0 0.0
    %89 = vmatpush1.msra.mxu0 %v29
    %90 = vmatprep.subr.mxu0 0.0
    %91 = vmatpush1.msra.mxu0 %v28
    %92 = vmatprep.subr.mxu0 0.0
    %93 = vmatpush2.msra.mxu0 %v59
    %94 = vmatprep.subr.mxu0 0.0
    %95 = vmatpush2.msra.mxu0 %v58
    %96 = vmatprep.subr.mxu0 0.0
    %97 = vmatpush2.msra.mxu0 %v57
    %98 = vmatprep.subr.mxu0 0.0
    %99 = vmatpush2.msra.mxu0 %v56
    %100 = vmatprep.subr.mxu0 0.0
    %101 = vmatpush2.msra.mxu0 %v55
    %102 = vmatprep.subr.mxu0 0.0
    %103 = vmatpush2.msra.mxu0 %v54
    %104 = vmatprep.subr.mxu0 0.0
    %105 = vmatpush2.msra.mxu0 %v53
    %106 = vmatprep.subr.mxu0 0.0
    %107 = vmatpush2.msra.mxu0 %v52
    %108 = vmatprep.subr.mxu0 0.0
    %109 = vmatpush2.msra.mxu0 %v51
    %110 = vmatprep.subr.mxu0 0.0
    %111 = vmatpush2.msra.mxu0 %v50
    %112 = vmatprep.subr.mxu0 0.0
    %113 = vmatpush2.msra.mxu0 %v49
    %114 = vmatprep.subr.mxu0 0.0
    %115 = vmatpush2.msra.mxu0 %v48
    %116 = vmatprep.subr.mxu0 0.0
    %117 = vmatpush2.msra.mxu0 %v47
    %118 = vmatprep.subr.mxu0 0.0
    %119 = vmatpush2.msra.mxu0 %v46
    %120 = vmatprep.subr.mxu0 0.0
    %121 = vmatpush2.msra.mxu0 %v45
    %122 = vmatprep.subr.mxu0 0.0
    %123 = vmatpush2.msra.mxu0 %v44
    %124 = vmatprep.mubr.f32.mxu0 %v27
    %125 = vmatmul.mubr.f32.gmra.mxu0 %v26
    %v126 = vpop.f32.mrf.mxu0
    %v127 = vadd.f32 0.0, %v126
    %v128 = vpop.f32.mrf.mxu0
    %129 = vdwg.mxu0
    %p130 = scmp.eq.s32.totalorder 0, 0
    // Predicated region
    $region14: #{apply.1} parent=1 // pred_check
      %p131 = pneg %p130
    $region15: #{apply.1} parent=1 // pred_check_branch
      %133 = sbr.rel (%p131) target = $region17
    $region16: #{apply.1} parent=1 // pred_region
      %134 = vst [vmem:[#allocation5] sm:$0xff] %v127
    $region17: #{apply.1} parent=1 // pred_fallthru
      _
    %p135 = scmp.gt.s32.totalorder 0, 0
    // Predicated region
    $region18: #{apply.1} parent=1 // pred_check
      %p136 = pneg %p135
    $region19: #{apply.1} parent=1 // pred_check_branch
      %138 = sbr.rel (%p136) target = $region21
    $region20: #{apply.1} parent=1 // pred_region
      %v139 = vld [vmem:[#allocation5] sm:$0xff]
      %v140 = vadd.f32 %v139, %v127
      %141 = vst [vmem:[#allocation5] sm:$0xff] %v140
    $region21: #{apply.1} parent=1 // pred_fallthru
      _
    // Predicated region
    $region22: #{apply.1} parent=1 // pred_check
      _
    $region23: #{apply.1} parent=1 // pred_check_branch
      %143 = sbr.rel (0) target = $region25
    $region24: #{apply.1} parent=1 // pred_region
      %s145 = ssub.s32 128, 128
      %146 = vsyncadd [#allocation4], %s145
      %s148 = sshll.u32 [#allocation5], 4
      %s149 = int_to_ptr.vmem [resolvable:$true] %s148
      %151 = dma.vmem_to_hbm [thread:$0]  %s149, 128, %s2, [#allocation4]
    $region25: #{apply.1} parent=1 // pred_fallthru
      _
    // Predicated region
    $region26: #{apply.1} parent=1 // pred_check
      _
    $region27: #{apply.1} parent=1 // pred_check_branch
      %153 = sbr.rel (0) target = $region29
    $region28: #{apply.1} parent=1 // pred_region
      %154 = dma.done [#allocation4], 128
    $region29: #{apply.1} parent=1 // pred_fallthru
      _
    %155 = vsyncpa [#allocation3], 1
    %156 = vsyncpa [#allocation4], 1

</llo_original>
